<compile_context>
chip_gen: v5e
topology: v5e:2x2
jax: 0.10.0
libtpu: 0.0.40
codegen_flags: <defaults>
</compile_context>

<pallas_src>
import jax
import jax.numpy as jnp
from jax.experimental import pallas as pl
from jax.experimental.pallas import tpu as pltpu


IN_FEATURES = 30 * 30          # 900
H1, H2, OUT = 128, 64, 10
TILE_B = 1024                  # max batch tile (multiple of 16)


def mlp2_kernel(x_ref, w1_ref, b1_ref, w2_ref, b2_ref, w3_ref, b3_ref, o_ref):
    # x_ref: (tb, 900) f32 ; o_ref: (tb, 10) f32
    # Layer 1 (dominant matmul): cast x to bf16 on the VPU (free in a
    # DMA-bound kernel), bf16 operands on the MXU, f32 accumulation.
    x = x_ref[...].astype(jnp.bfloat16)
    h1 = jnp.dot(x, w1_ref[...], preferred_element_type=jnp.float32)
    h1 = jnp.maximum(h1 + b1_ref[...], 0.0)

    # Layers 2/3 are tiny; keep fused, f32.
    h2 = jnp.dot(h1, w2_ref[...], preferred_element_type=jnp.float32)
    h2 = jnp.maximum(h2 + b2_ref[...], 0.0)
    logits = jnp.dot(h2, w3_ref[...], preferred_element_type=jnp.float32) + b3_ref[...]

    # Numerically stable log-softmax over the 10 real logits. Lane reductions
    # mask padded lanes with the proper identities (-inf for max, 0 for sum).
    m = jnp.max(logits, axis=-1, keepdims=True)
    shifted = logits - m
    lse = jnp.log(jnp.sum(jnp.exp(shifted), axis=-1, keepdims=True))
    o_ref[...] = shifted - lse


def _cdiv(a, b):
    return (a + b - 1) // b


def _round_up(n, m):
    return _cdiv(n, m) * m


@jax.jit
def mlp2_forward(x_nchw, params):
    """x_nchw: (B, 1, 30, 30) float32  ->  (B, 10) log-probabilities."""
    w1, b1, w2, b2, w3, b3 = params
    B = x_nchw.shape[0]
    x_flat = x_nchw.reshape(B, -1).astype(jnp.float32)   # torch Flatten semantics

    # ---- batch tiling: minimal padding, >=2 tiles for v7x megacore ----
    n_tiles = max(1, _cdiv(B, TILE_B))
    if B >= 32:
        n_tiles = max(n_tiles, 2)
    tb = _round_up(_cdiv(B, n_tiles), 16)     # batch tile, multiple of 16
    b_pad = tb * n_tiles                      # pads at most 15*n_tiles rows
    x_p = x_flat if b_pad == B else jnp.pad(x_flat, ((0, b_pad - B), (0, 0)))

    # Weights resident in VMEM; w1 as bf16 for the MXU-native layer-1 dot.
    w1_bf = w1.astype(jnp.bfloat16)

    cost = pl.CostEstimate(
        flops=2 * b_pad * (IN_FEATURES * H1 + H1 * H2 + H2 * OUT),
        transcendentals=b_pad * (OUT + 1),
        bytes_accessed=(x_p.size * 4 + w1_bf.size * 2
                        + (b1.size + w2.size + b2.size + w3.size + b3.size) * 4
                        + b_pad * OUT * 4),
    )

    out = pl.pallas_call(
        mlp2_kernel,
        out_shape=jax.ShapeDtypeStruct((b_pad, OUT), jnp.float32),
        grid=(n_tiles,),
        in_specs=[
            # x: streamed per batch tile (double-buffered by the pipeline);
            # last block dim == full array dim (900), so no 128-padding needed.
            pl.BlockSpec((tb, IN_FEATURES), lambda i: (i, 0)),
            # Weights/biases: constant block index -> fetched once, resident.
            pl.BlockSpec((IN_FEATURES, H1), lambda i: (0, 0)),
            pl.BlockSpec((1, H1), lambda i: (0, 0)),
            pl.BlockSpec((H1, H2), lambda i: (0, 0)),
            pl.BlockSpec((1, H2), lambda i: (0, 0)),
            pl.BlockSpec((H2, OUT), lambda i: (0, 0)),
            pl.BlockSpec((1, OUT), lambda i: (0, 0)),
        ],
        out_specs=pl.BlockSpec((tb, OUT), lambda i: (i, 0)),
        compiler_params=pltpu.CompilerParams(
            dimension_semantics=("parallel",),       # v7x: shard tiles over 2 TCs
            vmem_limit_bytes=48 * 1024 * 1024,       # > v5e 16MiB default, < v7x 64MiB
        ),
        cost_estimate=cost,
    )(x_p, w1_bf, b1, w2, b2, w3, b3)

    return out if b_pad == B else out[:B]


def init_params(key):
    """Deterministic synthetic init matching the module's parameter shapes."""
    k1, k2, k3 = jax.random.split(key, 3)

    def linear_init(k, fan_in, fan_out):
        kw, kb = jax.random.split(k)
        # Uniform(-1/sqrt(fan_in), 1/sqrt(fan_in)), same scale as torch default.
        bound = 1.0 / jnp.sqrt(fan_in)
        w = jax.random.uniform(kw, (fan_in, fan_out), jnp.float32, -bound, bound)
        b = jax.random.uniform(kb, (1, fan_out), jnp.float32, -bound, bound)
        return w, b

    w1, b1 = linear_init(k1, IN_FEATURES, H1)
    w2, b2 = linear_init(k2, H1, H2)
    w3, b3 = linear_init(k3, H2, OUT)
    return (w1, b1, w2, b2, w3, b3)


def reference_forward(x_nchw, params):
    """Pure-JAX f32 reference (mirrors the PyTorch module)."""
    w1, b1, w2, b2, w3, b3 = params
    x = x_nchw.reshape(x_nchw.shape[0], -1)
    h1 = jnp.maximum(x @ w1 + b1, 0.0)
    h2 = jnp.maximum(h1 @ w2 + b2, 0.0)
    logits = h2 @ w3 + b3
    return jax.nn.log_softmax(logits, axis=1)


def matched_reference_forward(x_nchw, params):
    """Reference with the kernel's precision (bf16 layer-1 operands, f32 acc)."""
    w1, b1, w2, b2, w3, b3 = params
    x = x_nchw.reshape(x_nchw.shape[0], -1)
    h1 = jnp.dot(x.astype(jnp.bfloat16), w1.astype(jnp.bfloat16),
                 preferred_element_type=jnp.float32) + b1
    h1 = jnp.maximum(h1, 0.0)
    h2 = jnp.maximum(h1 @ w2 + b2, 0.0)
    logits = h2 @ w3 + b3
    return jax.nn.log_softmax(logits, axis=1)


if __name__ == "__main__":
    key = jax.random.PRNGKey(0)
    k_params, k_x = jax.random.split(key)

    params = init_params(k_params)
    # Small deterministic input consistent with the module: B=2, NCHW (2,1,30,30)
    x = jax.random.normal(k_x, (2, 1, 30, 30), dtype=jnp.float32)

    out = jax.block_until_ready(mlp2_forward(x, params))
    assert out.shape == (2, 10)

    ref_matched = matched_reference_forward(x, params)   # same bf16 layer-1 precision
    ref_f32 = reference_forward(x, params)                # full-f32 module reference
    assert jnp.allclose(out, ref_matched, atol=1e-3, rtol=1e-3)
    assert jnp.allclose(out, ref_f32, atol=3e-2, rtol=3e-2)
    # log-probabilities should sum (in prob space) to ~1 per row
    assert jnp.allclose(jnp.sum(jnp.exp(out), axis=1), 1.0, atol=1e-5)

    print("KERNEL_OK")
</pallas_src>

<mosaic_0001>
module attributes {stable_mosaic.version = 11 : i64} {
  func.func @mlp2_kernel(%arg0: i32, %arg1: memref<16x900xf32, #tpu.memory_space<vmem>>, %arg2: memref<900x128xbf16, #tpu.memory_space<vmem>>, %arg3: memref<1x128xf32, #tpu.memory_space<vmem>>, %arg4: memref<128x64xf32, #tpu.memory_space<vmem>>, %arg5: memref<1x64xf32, #tpu.memory_space<vmem>>, %arg6: memref<64x10xf32, #tpu.memory_space<vmem>>, %arg7: memref<1x10xf32, #tpu.memory_space<vmem>>, %arg8: memref<16x10xf32, #tpu.memory_space<vmem>>) attributes {dimension_semantics = [#tpu.dimension_semantics<parallel>], iteration_bounds = array<i64: 1>, scalar_prefetch = 0 : i64, scratch_operands = 0 : i64, tpu.core_type = #tpu.core_type<tc>, window_params = [{transform_indices = @transform_0, window_bounds = array<i64: 16, 900>}, {pipeline_mode = #tpu.pipeline_mode<synchronous>, transform_indices = @transform_1, window_bounds = array<i64: 900, 128>}, {pipeline_mode = #tpu.pipeline_mode<synchronous>, transform_indices = @transform_2, window_bounds = array<i64: 1, 128>}, {pipeline_mode = #tpu.pipeline_mode<synchronous>, transform_indices = @transform_3, window_bounds = array<i64: 128, 64>}, {pipeline_mode = #tpu.pipeline_mode<synchronous>, transform_indices = @transform_4, window_bounds = array<i64: 1, 64>}, {pipeline_mode = #tpu.pipeline_mode<synchronous>, transform_indices = @transform_5, window_bounds = array<i64: 64, 10>}, {pipeline_mode = #tpu.pipeline_mode<synchronous>, transform_indices = @transform_6, window_bounds = array<i64: 1, 10>}, {transform_indices = @transform_7, window_bounds = array<i64: 16, 10>}]} {
    %c0 = arith.constant 0 : index
    %c0_0 = arith.constant 0 : index
    %0 = vector.load %arg1[%c0, %c0_0] : memref<16x900xf32, #tpu.memory_space<vmem>>, vector<16x900xf32>
    %1 = arith.truncf %0 : vector<16x900xf32> to vector<16x900xbf16>
    %c0_1 = arith.constant 0 : index
    %c0_2 = arith.constant 0 : index
    %2 = vector.load %arg2[%c0_1, %c0_2] : memref<900x128xbf16, #tpu.memory_space<vmem>>, vector<900x128xbf16>
    %cst = arith.constant dense<0.000000e+00> : vector<16x128xf32>
    %3 = tpu.matmul %1, %2, %cst {dimension_numbers = #tpu.dot_dimension_numbers<[1], [0], [0], [1], [0, 0, 1, 1], [], []>} : vector<16x900xbf16>, vector<900x128xbf16>, vector<16x128xf32> -> vector<16x128xf32>
    %c0_3 = arith.constant 0 : index
    %c0_4 = arith.constant 0 : index
    %4 = vector.load %arg3[%c0_3, %c0_4] : memref<1x128xf32, #tpu.memory_space<vmem>>, vector<1x128xf32>
    %5 = vector.broadcast %4 : vector<1x128xf32> to vector<16x128xf32>
    %6 = arith.addf %3, %5 : vector<16x128xf32>
    %cst_5 = arith.constant 0.000000e+00 : f32
    %7 = vector.broadcast %cst_5 : f32 to vector<16x128xf32>
    %8 = arith.maximumf %6, %7 : vector<16x128xf32>
    %c0_6 = arith.constant 0 : index
    %c0_7 = arith.constant 0 : index
    %9 = vector.load %arg4[%c0_6, %c0_7] : memref<128x64xf32, #tpu.memory_space<vmem>>, vector<128x64xf32>
    %cst_8 = arith.constant dense<0.000000e+00> : vector<16x64xf32>
    %10 = tpu.matmul %8, %9, %cst_8 {dimension_numbers = #tpu.dot_dimension_numbers<[1], [0], [0], [1], [0, 0, 1, 1], [], []>} : vector<16x128xf32>, vector<128x64xf32>, vector<16x64xf32> -> vector<16x64xf32>
    %c0_9 = arith.constant 0 : index
    %c0_10 = arith.constant 0 : index
    %11 = vector.load %arg5[%c0_9, %c0_10] : memref<1x64xf32, #tpu.memory_space<vmem>>, vector<1x64xf32>
    %12 = vector.broadcast %11 : vector<1x64xf32> to vector<16x64xf32>
    %13 = arith.addf %10, %12 : vector<16x64xf32>
    %cst_11 = arith.constant 0.000000e+00 : f32
    %14 = vector.broadcast %cst_11 : f32 to vector<16x64xf32>
    %15 = arith.maximumf %13, %14 : vector<16x64xf32>
    %c0_12 = arith.constant 0 : index
    %c0_13 = arith.constant 0 : index
    %16 = vector.load %arg6[%c0_12, %c0_13] : memref<64x10xf32, #tpu.memory_space<vmem>>, vector<64x10xf32>
    %cst_14 = arith.constant dense<0.000000e+00> : vector<16x10xf32>
    %17 = tpu.matmul %15, %16, %cst_14 {dimension_numbers = #tpu.dot_dimension_numbers<[1], [0], [0], [1], [0, 0, 1, 1], [], []>} : vector<16x64xf32>, vector<64x10xf32>, vector<16x10xf32> -> vector<16x10xf32>
    %c0_15 = arith.constant 0 : index
    %c0_16 = arith.constant 0 : index
    %18 = vector.load %arg7[%c0_15, %c0_16] : memref<1x10xf32, #tpu.memory_space<vmem>>, vector<1x10xf32>
    %19 = vector.broadcast %18 : vector<1x10xf32> to vector<16x10xf32>
    %20 = arith.addf %17, %19 : vector<16x10xf32>
    %cst_17 = arith.constant dense<0xFF800000> : vector<16xf32>
    %21 = vector.multi_reduction <maximumf>, %20, %cst_17 [1] : vector<16x10xf32> to vector<16xf32>
    %22 = vector.shape_cast %21 : vector<16xf32> to vector<16x1xf32>
    %23 = vector.broadcast %22 : vector<16x1xf32> to vector<16x10xf32>
    %24 = arith.subf %20, %23 : vector<16x10xf32>
    %25 = math.exp %24 : vector<16x10xf32>
    %cst_18 = arith.constant dense<0.000000e+00> : vector<16xf32>
    %26 = vector.multi_reduction <add>, %25, %cst_18 [1] : vector<16x10xf32> to vector<16xf32>
    %27 = vector.shape_cast %26 : vector<16xf32> to vector<16x1xf32>
    %28 = math.log %27 : vector<16x1xf32>
    %29 = vector.broadcast %28 : vector<16x1xf32> to vector<16x10xf32>
    %30 = arith.subf %24, %29 : vector<16x10xf32>
    %c0_19 = arith.constant 0 : index
    %c0_20 = arith.constant 0 : index
    %31 = vector.load %arg8[%c0_19, %c0_20] : memref<16x10xf32, #tpu.memory_space<vmem>>, vector<16x10xf32>
    tpu.vector_store %arg8[%c0_19, %c0_20], %30 {strides = array<i32>} : memref<16x10xf32, #tpu.memory_space<vmem>>, vector<16x10xf32>,
    return
  }
  func.func @transform_0(%arg0: i32) -> (i32, i32) {
    %c0_i32 = arith.constant 0 : i32
    %c0_i32_0 = arith.constant 0 : i32
    return %arg0, %c0_i32 : i32, i32
  }
  func.func @transform_1(%arg0: i32) -> (i32, i32) {
    %c0_i32 = arith.constant 0 : i32
    %c0_i32_0 = arith.constant 0 : i32
    %c0_i32_1 = arith.constant 0 : i32
    return %c0_i32, %c0_i32_0 : i32, i32
  }
  func.func @transform_2(%arg0: i32) -> (i32, i32) {
    %c0_i32 = arith.constant 0 : i32
    %c0_i32_0 = arith.constant 0 : i32
    %c0_i32_1 = arith.constant 0 : i32
    return %c0_i32, %c0_i32_0 : i32, i32
  }
  func.func @transform_3(%arg0: i32) -> (i32, i32) {
    %c0_i32 = arith.constant 0 : i32
    %c0_i32_0 = arith.constant 0 : i32
    %c0_i32_1 = arith.constant 0 : i32
    return %c0_i32, %c0_i32_0 : i32, i32
  }
  func.func @transform_4(%arg0: i32) -> (i32, i32) {
    %c0_i32 = arith.constant 0 : i32
    %c0_i32_0 = arith.constant 0 : i32
    %c0_i32_1 = arith.constant 0 : i32
    return %c0_i32, %c0_i32_0 : i32, i32
  }
  func.func @transform_5(%arg0: i32) -> (i32, i32) {
    %c0_i32 = arith.constant 0 : i32
    %c0_i32_0 = arith.constant 0 : i32
    %c0_i32_1 = arith.constant 0 : i32
    return %c0_i32, %c0_i32_0 : i32, i32
  }
  func.func @transform_6(%arg0: i32) -> (i32, i32) {
    %c0_i32 = arith.constant 0 : i32
    %c0_i32_0 = arith.constant 0 : i32
    %c0_i32_1 = arith.constant 0 : i32
    return %c0_i32, %c0_i32_0 : i32, i32
  }
  func.func @transform_7(%arg0: i32) -> (i32, i32) {
    %c0_i32 = arith.constant 0 : i32
    %c0_i32_0 = arith.constant 0 : i32
    return %arg0, %c0_i32 : i32, i32
  }
}

</mosaic_0001>

<llo_original>
// kernel: mlp2_forward.1
$region0: #{mlp2_forward.1}
  #allocation0 [shape = 'u32[]', space=smem, size = 0x4, offset = 0x4, fixed_abs, tag = 'smem constant byte address 0x4 - core index']
  #allocation1 [shape = 'u32[72,128]{1,0:T(1,128)}', space=vmem, size = 0x9000, scoped, tag = 'internal scratch']
  %s0 = inlined_call_operand.vmem [shape: f32[16,900], index: 0, kind: input, shape index: {}]
  %s1 = inlined_call_operand.vmem [shape: bf16[900,128], index: 1, kind: input, shape index: {}]
  %s2 = inlined_call_operand.vmem [shape: f32[1,128], index: 2, kind: input, shape index: {}]
  %s3 = inlined_call_operand.vmem [shape: f32[128,64], index: 3, kind: input, shape index: {}]
  %s4 = inlined_call_operand.vmem [shape: f32[1,64], index: 4, kind: input, shape index: {}]
  %s5 = inlined_call_operand.vmem [shape: f32[64,10], index: 5, kind: input, shape index: {}]
  %s6 = inlined_call_operand.vmem [shape: f32[1,10], index: 6, kind: input, shape index: {}]
  %s7 = inlined_call_operand.vmem [shape: f32[16,10], index: 7, kind: output, shape index: {}]
  %s8 = sld [smem:[#allocation0]]
  $region38: #{mlp2_forward.1} parent=0
    _
  %s10 = ssub.s32 1, %s8
  %s11 = scalar_select 0, %s10, %s8
  // Predicated region
  $region2: #{mlp2_forward.1} parent=0 // pred_check
    _
  $region3: #{mlp2_forward.1} parent=0 // pred_check_branch
    %13 = sbr.rel (0) target = $region5
  $region4: #{mlp2_forward.1} parent=0 // pred_region
    _
  $region5: #{mlp2_forward.1} parent=0 // pred_fallthru
    _
  // Predicated region
  $region6: #{mlp2_forward.1} parent=0 // pred_check
    _
  $region7: #{mlp2_forward.1} parent=0 // pred_check_branch
    %15 = sbr.rel (0) target = $region9
  $region8: #{mlp2_forward.1} parent=0 // pred_region
    _
  $region9: #{mlp2_forward.1} parent=0 // pred_fallthru
    _
  // Predicated region
  $region10: #{mlp2_forward.1} parent=0 // pred_check
    _
  $region11: #{mlp2_forward.1} parent=0 // pred_check_branch
    %17 = sbr.rel (0) target = $region13
  $region12: #{mlp2_forward.1} parent=0 // pred_region
    _
  $region13: #{mlp2_forward.1} parent=0 // pred_fallthru
    _
  // Predicated region
  $region14: #{mlp2_forward.1} parent=0 // pred_check
    _
  $region15: #{mlp2_forward.1} parent=0 // pred_check_branch
    %19 = sbr.rel (0) target = $region17
  $region16: #{mlp2_forward.1} parent=0 // pred_region
    _
  $region17: #{mlp2_forward.1} parent=0 // pred_fallthru
    _
  // Predicated region
  $region18: #{mlp2_forward.1} parent=0 // pred_check
    _
  $region19: #{mlp2_forward.1} parent=0 // pred_check_branch
    %21 = sbr.rel (0) target = $region21
  $region20: #{mlp2_forward.1} parent=0 // pred_region
    _
  $region21: #{mlp2_forward.1} parent=0 // pred_fallthru
    _
  // Predicated region
  $region22: #{mlp2_forward.1} parent=0 // pred_check
    _
  $region23: #{mlp2_forward.1} parent=0 // pred_check_branch
    %23 = sbr.rel (0) target = $region25
  $region24: #{mlp2_forward.1} parent=0 // pred_region
    _
  $region25: #{mlp2_forward.1} parent=0 // pred_fallthru
    _
  // Predicated region
  $region26: #{mlp2_forward.1} parent=0 // pred_check
    _
  $region27: #{mlp2_forward.1} parent=0 // pred_check_branch
    %25 = sbr.rel (0) target = $region29
  $region28: #{mlp2_forward.1} parent=0 // pred_region
    _
  $region29: #{mlp2_forward.1} parent=0 // pred_fallthru
    _
  %v27 = vld [vmem:[%s0] sm:$0xff]
  %v28 = vld [vmem:[%s0 + $0x8] sm:$0xff]
  %v29 = vld [vmem:[%s0 + $0x10] sm:$0xff]
  %v30 = vld [vmem:[%s0 + $0x18] sm:$0xff]
  %v31 = vld [vmem:[%s0 + $0x20] sm:$0xff]
  %v32 = vld [vmem:[%s0 + $0x28] sm:$0xff]
  %v33 = vld [vmem:[%s0 + $0x30] sm:$0xff]
  %v34 = vld [vmem:[%s0 + $0x38] sm:$0xff]
  %v35 = vld [vmem:[%s0 + $0x40] sm:$0xff]
  %v36 = vld [vmem:[%s0 + $0x48] sm:$0xff]
  %v37 = vld [vmem:[%s0 + $0x50] sm:$0xff]
  %v38 = vld [vmem:[%s0 + $0x58] sm:$0xff]
  %v39 = vld [vmem:[%s0 + $0x60] sm:$0xff]
  %v40 = vld [vmem:[%s0 + $0x68] sm:$0xff]
  %v41 = vld [vmem:[%s0 + $0x70] sm:$0xff]
  %v42 = vld [vmem:[%s0 + $0x78] sm:$0xff]
  %v43 = vpack.c.bf16 %v35, %v27
  %v44 = vpack.c.bf16 %v36, %v28
  %v45 = vpack.c.bf16 %v37, %v29
  %v46 = vpack.c.bf16 %v38, %v30
  %v47 = vpack.c.bf16 %v39, %v31
  %v48 = vpack.c.bf16 %v40, %v32
  %v49 = vpack.c.bf16 %v41, %v33
  %v50 = vpack.c.bf16 %v42, %v34
  %v51 = vld [vmem:[%s1] sm:$0xf]
  %v52 = vld [vmem:[%s1 + $0x4] sm:$0xf]
  %v53 = vld [vmem:[%s1 + $0x8] sm:$0xf]
  %v54 = vld [vmem:[%s1 + $0xc] sm:$0xf]
  %v55 = vld [vmem:[%s1 + $0x10] sm:$0xf]
  %v56 = vld [vmem:[%s1 + $0x14] sm:$0xf]
  %v57 = vld [vmem:[%s1 + $0x18] sm:$0xf]
  %v58 = vld [vmem:[%s1 + $0x1c] sm:$0xf]
  %v59 = vld [vmem:[%s1 + $0x20] sm:$0xf]
  %v60 = vld [vmem:[%s1 + $0x24] sm:$0xf]
  %v61 = vld [vmem:[%s1 + $0x28] sm:$0xf]
  %v62 = vld [vmem:[%s1 + $0x2c] sm:$0xf]
  %v63 = vld [vmem:[%s1 + $0x30] sm:$0xf]
  %v64 = vld [vmem:[%s1 + $0x34] sm:$0xf]
  %v65 = vld [vmem:[%s1 + $0x38] sm:$0xf]
  %v66 = vld [vmem:[%s1 + $0x3c] sm:$0xf]
  %v67 = vld [vmem:[%s1 + $0x40] sm:$0xf]
  %v68 = vld [vmem:[%s1 + $0x44] sm:$0xf]
  %v69 = vld [vmem:[%s1 + $0x48] sm:$0xf]
  %v70 = vld [vmem:[%s1 + $0x4c] sm:$0xf]
  %v71 = vld [vmem:[%s1 + $0x50] sm:$0xf]
  %v72 = vld [vmem:[%s1 + $0x54] sm:$0xf]
  %v73 = vld [vmem:[%s1 + $0x58] sm:$0xf]
  %v74 = vld [vmem:[%s1 + $0x5c] sm:$0xf]
  %v75 = vld [vmem:[%s1 + $0x60] sm:$0xf]
  %v76 = vld [vmem:[%s1 + $0x64] sm:$0xf]
  %v77 = vld [vmem:[%s1 + $0x68] sm:$0xf]
  %v78 = vld [vmem:[%s1 + $0x6c] sm:$0xf]
  %v79 = vld [vmem:[%s1 + $0x70] sm:$0xf]
  %v80 = vld [vmem:[%s1 + $0x74] sm:$0xf]
  %v81 = vld [vmem:[%s1 + $0x78] sm:$0xf]
  %v82 = vld [vmem:[%s1 + $0x7c] sm:$0xf]
  %v83 = vld [vmem:[%s1 + $0x80] sm:$0xf]
  %v84 = vld [vmem:[%s1 + $0x84] sm:$0xf]
  %v85 = vld [vmem:[%s1 + $0x88] sm:$0xf]
  %v86 = vld [vmem:[%s1 + $0x8c] sm:$0xf]
  %v87 = vld [vmem:[%s1 + $0x90] sm:$0xf]
  %v88 = vld [vmem:[%s1 + $0x94] sm:$0xf]
  %v89 = vld [vmem:[%s1 + $0x98] sm:$0xf]
  %v90 = vld [vmem:[%s1 + $0x9c] sm:$0xf]
  %v91 = vld [vmem:[%s1 + $0xa0] sm:$0xf]
  %v92 = vld [vmem:[%s1 + $0xa4] sm:$0xf]
  %v93 = vld [vmem:[%s1 + $0xa8] sm:$0xf]
  %v94 = vld [vmem:[%s1 + $0xac] sm:$0xf]
  %v95 = vld [vmem:[%s1 + $0xb0] sm:$0xf]
  %v96 = vld [vmem:[%s1 + $0xb4] sm:$0xf]
  %v97 = vld [vmem:[%s1 + $0xb8] sm:$0xf]
  %v98 = vld [vmem:[%s1 + $0xbc] sm:$0xf]
  %v99 = vld [vmem:[%s1 + $0xc0] sm:$0xf]
  %v100 = vld [vmem:[%s1 + $0xc4] sm:$0xf]
  %v101 = vld [vmem:[%s1 + $0xc8] sm:$0xf]
  %v102 = vld [vmem:[%s1 + $0xcc] sm:$0xf]
  %v103 = vld [vmem:[%s1 + $0xd0] sm:$0xf]
  %v104 = vld [vmem:[%s1 + $0xd4] sm:$0xf]
  %v105 = vld [vmem:[%s1 + $0xd8] sm:$0xf]
  %v106 = vld [vmem:[%s1 + $0xdc] sm:$0xf]
  %v107 = vld [vmem:[%s1 + $0xe0] sm:$0xf]
  %v108 = vld [vmem:[%s1 + $0xe4] sm:$0xf]
  %v109 = vld [vmem:[%s1 + $0xe8] sm:$0xf]
  %v110 = vld [vmem:[%s1 + $0xec] sm:$0xf]
  %v111 = vld [vmem:[%s1 + $0xf0] sm:$0xf]
  %v112 = vld [vmem:[%s1 + $0xf4] sm:$0xf]
  %v113 = vld [vmem:[%s1 + $0xf8] sm:$0xf]
  %v114 = vld [vmem:[%s1 + $0xfc] sm:$0xf]
  %v115 = vld [vmem:[%s1 + $0x100] sm:$0xf]
  %v116 = vld [vmem:[%s1 + $0x104] sm:$0xf]
  %v117 = vld [vmem:[%s1 + $0x108] sm:$0xf]
  %v118 = vld [vmem:[%s1 + $0x10c] sm:$0xf]
  %v119 = vld [vmem:[%s1 + $0x110] sm:$0xf]
  %v120 = vld [vmem:[%s1 + $0x114] sm:$0xf]
  %v121 = vld [vmem:[%s1 + $0x118] sm:$0xf]
  %v122 = vld [vmem:[%s1 + $0x11c] sm:$0xf]
  %v123 = vld [vmem:[%s1 + $0x120] sm:$0xf]
  %v124 = vld [vmem:[%s1 + $0x124] sm:$0xf]
  %v125 = vld [vmem:[%s1 + $0x128] sm:$0xf]
  %v126 = vld [vmem:[%s1 + $0x12c] sm:$0xf]
  %v127 = vld [vmem:[%s1 + $0x130] sm:$0xf]
  %v128 = vld [vmem:[%s1 + $0x134] sm:$0xf]
  %v129 = vld [vmem:[%s1 + $0x138] sm:$0xf]
  %v130 = vld [vmem:[%s1 + $0x13c] sm:$0xf]
  %v131 = vld [vmem:[%s1 + $0x140] sm:$0xf]
  %v132 = vld [vmem:[%s1 + $0x144] sm:$0xf]
  %v133 = vld [vmem:[%s1 + $0x148] sm:$0xf]
  %v134 = vld [vmem:[%s1 + $0x14c] sm:$0xf]
  %v135 = vld [vmem:[%s1 + $0x150] sm:$0xf]
  %v136 = vld [vmem:[%s1 + $0x154] sm:$0xf]
  %v137 = vld [vmem:[%s1 + $0x158] sm:$0xf]
  %v138 = vld [vmem:[%s1 + $0x15c] sm:$0xf]
  %v139 = vld [vmem:[%s1 + $0x160] sm:$0xf]
  %v140 = vld [vmem:[%s1 + $0x164] sm:$0xf]
  %v141 = vld [vmem:[%s1 + $0x168] sm:$0xf]
  %v142 = vld [vmem:[%s1 + $0x16c] sm:$0xf]
  %v143 = vld [vmem:[%s1 + $0x170] sm:$0xf]
  %v144 = vld [vmem:[%s1 + $0x174] sm:$0xf]
  %v145 = vld [vmem:[%s1 + $0x178] sm:$0xf]
  %v146 = vld [vmem:[%s1 + $0x17c] sm:$0xf]
  %v147 = vld [vmem:[%s1 + $0x180] sm:$0xf]
  %v148 = vld [vmem:[%s1 + $0x184] sm:$0xf]
  %v149 = vld [vmem:[%s1 + $0x188] sm:$0xf]
  %v150 = vld [vmem:[%s1 + $0x18c] sm:$0xf]
  %v151 = vld [vmem:[%s1 + $0x190] sm:$0xf]
  %v152 = vld [vmem:[%s1 + $0x194] sm:$0xf]
  %v153 = vld [vmem:[%s1 + $0x198] sm:$0xf]
  %v154 = vld [vmem:[%s1 + $0x19c] sm:$0xf]
  %v155 = vld [vmem:[%s1 + $0x1a0] sm:$0xf]
  %v156 = vld [vmem:[%s1 + $0x1a4] sm:$0xf]
  %v157 = vld [vmem:[%s1 + $0x1a8] sm:$0xf]
  %v158 = vld [vmem:[%s1 + $0x1ac] sm:$0xf]
  %v159 = vld [vmem:[%s1 + $0x1b0] sm:$0xf]
  %v160 = vld [vmem:[%s1 + $0x1b4] sm:$0xf]
  %v161 = vld [vmem:[%s1 + $0x1b8] sm:$0xf]
  %v162 = vld [vmem:[%s1 + $0x1bc] sm:$0xf]
  %v163 = vld [vmem:[%s1 + $0x1c0] sm:$0x3]
  %v164 = vld [vmem:[%s2] sm:$0x1]
  %v166 = vperm.slane %v164, 0
  %v281 = vunpack.c.l.b16 %v51
  %v282 = vunpack.c.l.b16 %v52
  %v283 = vunpack.c.l.b16 %v53
  %v284 = vunpack.c.l.b16 %v54
  %v285 = vunpack.c.l.b16 %v55
  %v286 = vunpack.c.l.b16 %v56
  %v287 = vunpack.c.l.b16 %v57
  %v288 = vunpack.c.l.b16 %v58
  %v289 = vunpack.c.l.b16 %v59
  %v290 = vunpack.c.l.b16 %v60
  %v291 = vunpack.c.l.b16 %v61
  %v292 = vunpack.c.l.b16 %v62
  %v293 = vunpack.c.l.b16 %v63
  %v294 = vunpack.c.l.b16 %v64
  %v295 = vunpack.c.l.b16 %v65
  %v296 = vunpack.c.l.b16 %v66
  %v297 = vunpack.c.l.b16 %v67
  %v298 = vunpack.c.l.b16 %v68
  %v299 = vunpack.c.l.b16 %v69
  %v300 = vunpack.c.l.b16 %v70
  %v301 = vunpack.c.l.b16 %v71
  %v302 = vunpack.c.l.b16 %v72
  %v303 = vunpack.c.l.b16 %v73
  %v304 = vunpack.c.l.b16 %v74
  %v305 = vunpack.c.l.b16 %v75
  %v306 = vunpack.c.l.b16 %v76
  %v307 = vunpack.c.l.b16 %v77
  %v308 = vunpack.c.l.b16 %v78
  %v309 = vunpack.c.l.b16 %v79
  %v310 = vunpack.c.l.b16 %v80
  %v311 = vunpack.c.l.b16 %v81
  %v312 = vunpack.c.l.b16 %v82
  %v313 = vunpack.c.l.b16 %v83
  %v314 = vunpack.c.l.b16 %v84
  %v315 = vunpack.c.l.b16 %v85
  %v316 = vunpack.c.l.b16 %v86
  %v317 = vunpack.c.l.b16 %v87
  %v318 = vunpack.c.l.b16 %v88
  %v319 = vunpack.c.l.b16 %v89
  %v320 = vunpack.c.l.b16 %v90
  %v321 = vunpack.c.l.b16 %v91
  %v322 = vunpack.c.l.b16 %v92
  %v323 = vunpack.c.l.b16 %v93
  %v324 = vunpack.c.l.b16 %v94
  %v325 = vunpack.c.l.b16 %v95
  %v326 = vunpack.c.l.b16 %v96
  %v327 = vunpack.c.l.b16 %v97
  %v328 = vunpack.c.l.b16 %v98
  %v329 = vunpack.c.l.b16 %v99
  %v330 = vunpack.c.l.b16 %v100
  %v331 = vunpack.c.l.b16 %v101
  %v332 = vunpack.c.l.b16 %v102
  %v333 = vunpack.c.l.b16 %v103
  %v334 = vunpack.c.l.b16 %v104
  %v335 = vunpack.c.l.b16 %v105
  %v336 = vunpack.c.l.b16 %v106
  %v337 = vunpack.c.l.b16 %v107
  %v338 = vunpack.c.l.b16 %v108
  %v339 = vunpack.c.l.b16 %v109
  %v340 = vunpack.c.l.b16 %v110
  %v341 = vunpack.c.l.b16 %v111
  %v342 = vunpack.c.l.b16 %v112
  %v343 = vunpack.c.l.b16 %v113
  %v344 = vunpack.c.l.b16 %v114
  %v345 = vunpack.c.l.b16 %v115
  %v346 = vunpack.c.l.b16 %v116
  %v347 = vunpack.c.l.b16 %v117
  %v348 = vunpack.c.l.b16 %v118
  %v349 = vunpack.c.l.b16 %v119
  %v350 = vunpack.c.l.b16 %v120
  %v351 = vunpack.c.l.b16 %v121
  %v352 = vunpack.c.l.b16 %v122
  %v353 = vunpack.c.l.b16 %v123
  %v354 = vunpack.c.l.b16 %v124
  %v355 = vunpack.c.l.b16 %v125
  %v356 = vunpack.c.l.b16 %v126
  %v357 = vunpack.c.l.b16 %v127
  %v358 = vunpack.c.l.b16 %v128
  %v359 = vunpack.c.l.b16 %v129
  %v360 = vunpack.c.l.b16 %v130
  %v361 = vunpack.c.l.b16 %v131
  %v362 = vunpack.c.l.b16 %v132
  %v363 = vunpack.c.l.b16 %v133
  %v364 = vunpack.c.l.b16 %v134
  %v365 = vunpack.c.l.b16 %v135
  %v366 = vunpack.c.l.b16 %v136
  %v367 = vunpack.c.l.b16 %v137
  %v368 = vunpack.c.l.b16 %v138
  %v369 = vunpack.c.l.b16 %v139
  %v370 = vunpack.c.l.b16 %v140
  %v371 = vunpack.c.l.b16 %v141
  %v372 = vunpack.c.l.b16 %v142
  %v373 = vunpack.c.l.b16 %v143
  %v374 = vunpack.c.l.b16 %v144
  %v375 = vunpack.c.l.b16 %v145
  %v376 = vunpack.c.l.b16 %v146
  %v377 = vunpack.c.l.b16 %v147
  %v378 = vunpack.c.l.b16 %v148
  %v379 = vunpack.c.l.b16 %v149
  %v380 = vunpack.c.l.b16 %v150
  %v381 = vunpack.c.l.b16 %v151
  %v382 = vunpack.c.l.b16 %v152
  %v383 = vunpack.c.l.b16 %v153
  %v384 = vunpack.c.l.b16 %v154
  %v385 = vunpack.c.l.b16 %v155
  %v386 = vunpack.c.l.b16 %v156
  %v387 = vunpack.c.l.b16 %v157
  %v388 = vunpack.c.l.b16 %v158
  %v389 = vunpack.c.l.b16 %v159
  %v390 = vunpack.c.l.b16 %v160
  %v391 = vunpack.c.l.b16 %v161
  %v392 = vunpack.c.l.b16 %v162
  %v393 = vunpack.c.l.b16 %v163
  %v394 = vpack.c.b16 %v282, %v281
  %v395 = vpack.c.b16 %v284, %v283
  %v396 = vpack.c.b16 %v286, %v285
  %v397 = vpack.c.b16 %v288, %v287
  %v398 = vpack.c.b16 %v290, %v289
  %v399 = vpack.c.b16 %v292, %v291
  %v400 = vpack.c.b16 %v294, %v293
  %v401 = vpack.c.b16 %v296, %v295
  %v402 = vpack.c.b16 %v298, %v297
  %v403 = vpack.c.b16 %v300, %v299
  %v404 = vpack.c.b16 %v302, %v301
  %v405 = vpack.c.b16 %v304, %v303
  %v406 = vpack.c.b16 %v306, %v305
  %v407 = vpack.c.b16 %v308, %v307
  %v408 = vpack.c.b16 %v310, %v309
  %v409 = vpack.c.b16 %v312, %v311
  %v410 = vpack.c.b16 %v314, %v313
  %v411 = vpack.c.b16 %v316, %v315
  %v412 = vpack.c.b16 %v318, %v317
  %v413 = vpack.c.b16 %v320, %v319
  %v414 = vpack.c.b16 %v322, %v321
  %v415 = vpack.c.b16 %v324, %v323
  %v416 = vpack.c.b16 %v326, %v325
  %v417 = vpack.c.b16 %v328, %v327
  %v418 = vpack.c.b16 %v330, %v329
  %v419 = vpack.c.b16 %v332, %v331
  %v420 = vpack.c.b16 %v334, %v333
  %v421 = vpack.c.b16 %v336, %v335
  %v422 = vpack.c.b16 %v338, %v337
  %v423 = vpack.c.b16 %v340, %v339
  %v424 = vpack.c.b16 %v342, %v341
  %v425 = vpack.c.b16 %v344, %v343
  %v426 = vpack.c.b16 %v346, %v345
  %v427 = vpack.c.b16 %v348, %v347
  %v428 = vpack.c.b16 %v350, %v349
  %v429 = vpack.c.b16 %v352, %v351
  %v430 = vpack.c.b16 %v354, %v353
  %v431 = vpack.c.b16 %v356, %v355
  %v432 = vpack.c.b16 %v358, %v357
  %v433 = vpack.c.b16 %v360, %v359
  %v434 = vpack.c.b16 %v362, %v361
  %v435 = vpack.c.b16 %v364, %v363
  %v436 = vpack.c.b16 %v366, %v365
  %v437 = vpack.c.b16 %v368, %v367
  %v438 = vpack.c.b16 %v370, %v369
  %v439 = vpack.c.b16 %v372, %v371
  %v440 = vpack.c.b16 %v374, %v373
  %v441 = vpack.c.b16 %v376, %v375
  %v442 = vpack.c.b16 %v378, %v377
  %v443 = vpack.c.b16 %v380, %v379
  %v444 = vpack.c.b16 %v382, %v381
  %v445 = vpack.c.b16 %v384, %v383
  %v446 = vpack.c.b16 %v386, %v385
  %v447 = vpack.c.b16 %v388, %v387
  %v448 = vpack.c.b16 %v390, %v389
  %v449 = vpack.c.b16 %v392, %v391
  %v450 = vpack.c.b16 %v393, %v393
  %vm507 = vcmask 31744
  %v509 = vsel %vm507, %v50, 0
  %vm511 = vcmask 1041408
  %v513 = vsel %vm511, %v450, 0
  %515 = vmatpush.bf16.msra.mxu0 %v401
  %516 = vmatpush.bf16.msra.mxu0 %v400
  %517 = vmatpush.bf16.msra.mxu0 %v399
  %518 = vmatpush.bf16.msra.mxu0 %v398
  %519 = vmatpush.bf16.msra.mxu0 %v397
  %520 = vmatpush.bf16.msra.mxu0 %v396
  %521 = vmatpush.bf16.msra.mxu0 %v395
  %522 = vmatpush.bf16.msra.mxu0 %v394
  %523 = vmatmul.bf16.gmra.mxu0 %v43
  %v524 = vpop.f32.mrf.mxu0
  %v525 = vadd.f32 %v166, %v524
  %v526 = vpop.f32.mrf.mxu0
  %v527 = vadd.f32 %v166, %v526
  %528 = vdwg.mxu0
  %529 = vmatpush.bf16.msra.mxu0 %v409
  %530 = vmatpush.bf16.msra.mxu0 %v408
  %531 = vmatpush.bf16.msra.mxu0 %v407
  %532 = vmatpush.bf16.msra.mxu0 %v406
  %533 = vmatpush.bf16.msra.mxu0 %v405
  %534 = vmatpush.bf16.msra.mxu0 %v404
  %535 = vmatpush.bf16.msra.mxu0 %v403
  %536 = vmatpush.bf16.msra.mxu0 %v402
  %537 = vmatmul.bf16.gmra.mxu0 %v44
  %v538 = vpop.f32.mrf.mxu0
  %v539 = vadd.f32 %v525, %v538
  %v540 = vpop.f32.mrf.mxu0
  %v541 = vadd.f32 %v527, %v540
  %542 = vdwg.mxu0
  %543 = vmatpush.bf16.msra.mxu0 %v417
  %544 = vmatpush.bf16.msra.mxu0 %v416
  %545 = vmatpush.bf16.msra.mxu0 %v415
  %546 = vmatpush.bf16.msra.mxu0 %v414
  %547 = vmatpush.bf16.msra.mxu0 %v413
  %548 = vmatpush.bf16.msra.mxu0 %v412
  %549 = vmatpush.bf16.msra.mxu0 %v411
  %550 = vmatpush.bf16.msra.mxu0 %v410
  %551 = vmatmul.bf16.gmra.mxu0 %v45
  %v552 = vpop.f32.mrf.mxu0
  %v553 = vadd.f32 %v539, %v552
  %v554 = vpop.f32.mrf.mxu0
  %v555 = vadd.f32 %v541, %v554
  %556 = vdwg.mxu0
  %557 = vmatpush.bf16.msra.mxu0 %v425
  %558 = vmatpush.bf16.msra.mxu0 %v424
  %559 = vmatpush.bf16.msra.mxu0 %v423
  %560 = vmatpush.bf16.msra.mxu0 %v422
  %561 = vmatpush.bf16.msra.mxu0 %v421
  %562 = vmatpush.bf16.msra.mxu0 %v420
  %563 = vmatpush.bf16.msra.mxu0 %v419
  %564 = vmatpush.bf16.msra.mxu0 %v418
  %565 = vmatmul.bf16.gmra.mxu0 %v46
  %v566 = vpop.f32.mrf.mxu0
  %v567 = vadd.f32 %v553, %v566
  %v568 = vpop.f32.mrf.mxu0
  %v569 = vadd.f32 %v555, %v568
  %570 = vdwg.mxu0
  %571 = vmatpush.bf16.msra.mxu0 %v433
  %572 = vmatpush.bf16.msra.mxu0 %v432
  %573 = vmatpush.bf16.msra.mxu0 %v431
  %574 = vmatpush.bf16.msra.mxu0 %v430
  %575 = vmatpush.bf16.msra.mxu0 %v429
  %576 = vmatpush.bf16.msra.mxu0 %v428
  %577 = vmatpush.bf16.msra.mxu0 %v427
  %578 = vmatpush.bf16.msra.mxu0 %v426
  %579 = vmatmul.bf16.gmra.mxu0 %v47
  %v580 = vpop.f32.mrf.mxu0
  %v581 = vadd.f32 %v567, %v580
  %v582 = vpop.f32.mrf.mxu0
  %v583 = vadd.f32 %v569, %v582
  %584 = vdwg.mxu0
  %585 = vmatpush.bf16.msra.mxu0 %v441
  %586 = vmatpush.bf16.msra.mxu0 %v440
  %587 = vmatpush.bf16.msra.mxu0 %v439
  %588 = vmatpush.bf16.msra.mxu0 %v438
  %589 = vmatpush.bf16.msra.mxu0 %v437
  %590 = vmatpush.bf16.msra.mxu0 %v436
  %591 = vmatpush.bf16.msra.mxu0 %v435
  %592 = vmatpush.bf16.msra.mxu0 %v434
  %593 = vmatmul.bf16.gmra.mxu0 %v48
  %v594 = vpop.f32.mrf.mxu0
  %v595 = vadd.f32 %v581, %v594
  %v596 = vpop.f32.mrf.mxu0
  %v597 = vadd.f32 %v583, %v596
  %598 = vdwg.mxu0
  %599 = vmatpush.bf16.msra.mxu0 %v449
  %600 = vmatpush.bf16.msra.mxu0 %v448
  %601 = vmatpush.bf16.msra.mxu0 %v447
  %602 = vmatpush.bf16.msra.mxu0 %v446
  %603 = vmatpush.bf16.msra.mxu0 %v445
  %604 = vmatpush.bf16.msra.mxu0 %v444
  %605 = vmatpush.bf16.msra.mxu0 %v443
  %606 = vmatpush.bf16.msra.mxu0 %v442
  %607 = vmatmul.bf16.gmra.mxu0 %v49
  %v608 = vpop.f32.mrf.mxu0
  %v609 = vadd.f32 %v595, %v608
  %v610 = vpop.f32.mrf.mxu0
  %v611 = vadd.f32 %v597, %v610
  %612 = vdwg.mxu0
  %613 = vmatpush.bf16.msra.mxu0 0
  %614 = vmatpush.bf16.msra.mxu0 0
  %615 = vmatpush.bf16.msra.mxu0 0
  %616 = vmatpush.bf16.msra.mxu0 0
  %617 = vmatpush.bf16.msra.mxu0 0
  %618 = vmatpush.bf16.msra.mxu0 0
  %619 = vmatpush.bf16.msra.mxu0 0
  %620 = vmatpush.bf16.msra.mxu0 %v513
  %621 = vmatmul.bf16.gmra.mxu0 %v509
  %v622 = vpop.f32.mrf.mxu0
  %v623 = vadd.f32 %v609, %v622
  %v624 = vpop.f32.mrf.mxu0
  %v625 = vadd.f32 %v611, %v624
  %626 = vdwg.mxu0
  %v627 = vmax.f32 %v623, 0.0
  %v628 = vmax.f32 %v625, 0.0
  %v629 = vld [vmem:[%s3] sm:$0xff]
  %v630 = vld [vmem:[%s3 + $0x8] sm:$0xff]
  %v631 = vld [vmem:[%s3 + $0x10] sm:$0xff]
  %v632 = vld [vmem:[%s3 + $0x18] sm:$0xff]
  %v633 = vld [vmem:[%s3 + $0x20] sm:$0xff]
  %v634 = vld [vmem:[%s3 + $0x28] sm:$0xff]
  %v635 = vld [vmem:[%s3 + $0x30] sm:$0xff]
  %v636 = vld [vmem:[%s3 + $0x38] sm:$0xff]
  %v637 = vld [vmem:[%s3 + $0x40] sm:$0xff]
  %v638 = vld [vmem:[%s3 + $0x48] sm:$0xff]
  %v639 = vld [vmem:[%s3 + $0x50] sm:$0xff]
  %v640 = vld [vmem:[%s3 + $0x58] sm:$0xff]
  %v641 = vld [vmem:[%s3 + $0x60] sm:$0xff]
  %v642 = vld [vmem:[%s3 + $0x68] sm:$0xff]
  %v643 = vld [vmem:[%s3 + $0x70] sm:$0xff]
  %v644 = vld [vmem:[%s3 + $0x78] sm:$0xff]
  %v645 = vld [vmem:[%s4] sm:$0x1]
  %v647 = vperm.slane %v645, 0
  %649 = vmatpush.msra.mxu0 %v644
  %650 = vmatpush.msra.mxu0 %v643
  %651 = vmatpush.msra.mxu0 %v642
  %652 = vmatpush.msra.mxu0 %v641
  %653 = vmatpush.msra.mxu0 %v640
  %654 = vmatpush.msra.mxu0 %v639
  %655 = vmatpush.msra.mxu0 %v638
  %656 = vmatpush.msra.mxu0 %v637
  %657 = vmatpush.msra.mxu0 %v636
  %658 = vmatpush.msra.mxu0 %v635
  %659 = vmatpush.msra.mxu0 %v634
  %660 = vmatpush.msra.mxu0 %v633
  %661 = vmatpush.msra.mxu0 %v632
  %662 = vmatpush.msra.mxu0 %v631
  %663 = vmatpush.msra.mxu0 %v630
  %664 = vmatpush.msra.mxu0 %v629
  %665 = vmatmul.f32.gmra.mxu0 %v627
  %v666 = vpop.f32.mrf.mxu0
  %v667 = vadd.f32 %v647, %v666
  %668 = vmatmul.f32.gmra.mxu0 %v628
  %v669 = vpop.f32.mrf.mxu0
  %v670 = vadd.f32 %v647, %v669
  %671 = vdwg.mxu0
  %v672 = vmax.f32 %v667, 0.0
  %v673 = vmax.f32 %v670, 0.0
  %v674 = vld [vmem:[%s5] sm:$0xff]
  %v675 = vld [vmem:[%s5 + $0x8] sm:$0xff]
  %v676 = vld [vmem:[%s5 + $0x10] sm:$0xff]
  %v677 = vld [vmem:[%s5 + $0x18] sm:$0xff]
  %v678 = vld [vmem:[%s5 + $0x20] sm:$0xff]
  %v679 = vld [vmem:[%s5 + $0x28] sm:$0xff]
  %v680 = vld [vmem:[%s5 + $0x30] sm:$0xff]
  %v681 = vld [vmem:[%s5 + $0x38] sm:$0xff]
  %v682 = vld [vmem:[%s6] sm:$0x1]
  %v684 = vperm.slane %v682, 0
  %vm686 = vcmask 523264
  %v688 = vsel %vm686, %v672, 0
  %v691 = vsel %vm686, %v673, 0
  %693 = vmatpush.msra.mxu0 0.0
  %694 = vmatpush.msra.mxu0 0.0
  %695 = vmatpush.msra.mxu0 0.0
  %696 = vmatpush.msra.mxu0 0.0
  %697 = vmatpush.msra.mxu0 0.0
  %698 = vmatpush.msra.mxu0 0.0
  %699 = vmatpush.msra.mxu0 0.0
  %700 = vmatpush.msra.mxu0 0.0
  %701 = vmatpush.msra.mxu0 %v681
  %702 = vmatpush.msra.mxu0 %v680
  %703 = vmatpush.msra.mxu0 %v679
  %704 = vmatpush.msra.mxu0 %v678
  %705 = vmatpush.msra.mxu0 %v677
  %706 = vmatpush.msra.mxu0 %v676
  %707 = vmatpush.msra.mxu0 %v675
  %708 = vmatpush.msra.mxu0 %v674
  %709 = vmatmul.f32.gmra.mxu0 %v688
  %v710 = vpop.f32.mrf.mxu0
  %v711 = vadd.f32 %v684, %v710
  %712 = vmatmul.f32.gmra.mxu0 %v691
  %v713 = vpop.f32.mrf.mxu0
  %v714 = vadd.f32 %v684, %v713
  %715 = vdwg.mxu0
  %vm716 = vcmask 80896
  %v717 = vsel %vm716, %v711, -inf
  %718 = vmax.xlane.f32.xlu0 %v717
  %v719 = vpop.xlane.xlu0 %718
  %v720 = vsel %vm716, %v714, -inf
  %721 = vmax.xlane.f32.xlu0 %v720
  %v722 = vpop.xlane.xlu0 %721
  %v723 = vsub.f32 %v711, %v719
  %v724 = vsub.f32 %v714, %v722
  %v725 = vmul.f32 %v723, 1.442695
  %v726 = vpow.pop %v725
  %v727 = vmul.f32 %v724, 1.442695
  %v728 = vpow.pop %v727
  %v729 = vsel %vm716, %v726, 0.0
  %730 = vadd.xlane.f32.xlu0 %v729
  %v731 = vpop.xlane.xlu0 %730
  %v732 = vsel %vm716, %v728, 0.0
  %733 = vadd.xlane.f32.xlu0 %v732
  %v734 = vpop.xlane.xlu0 %733
  %v735 = vlog2.pop %v731
  %v736 = vmul.f32 %v735, 0.6931472
  %v737 = vlog2.pop %v734
  %v738 = vmul.f32 %v737, 0.6931472
  %v739 = vsub.f32 %v723, %v736
  %v740 = vsub.f32 %v724, %v738
  %741 = vst.msk [vmem:[%s7] sm:$0xff] %vm716, %v739
  %742 = vst.msk [vmem:[%s7 + $0x8] sm:$0xff] %vm716, %v740
  // Predicated region
  $region30: #{mlp2_forward.1} parent=0 // pred_check
    _
  $region31: #{mlp2_forward.1} parent=0 // pred_check_branch
    %744 = sbr.rel (0) target = $region33
  $region32: #{mlp2_forward.1} parent=0 // pred_region
    _
  $region33: #{mlp2_forward.1} parent=0 // pred_fallthru
    _
  // Predicated region
  $region34: #{mlp2_forward.1} parent=0 // pred_check
    _
  $region35: #{mlp2_forward.1} parent=0 // pred_check_branch
    %746 = sbr.rel (0) target = $region37
  $region36: #{mlp2_forward.1} parent=0 // pred_region
    _
  $region37: #{mlp2_forward.1} parent=0 // pred_fallthru
    _

</llo_original>
